<compile_context>
chip_gen: v7x
topology: tpu7x:2x2x1
jax: 0.10.0
libtpu: 0.0.40
codegen_flags: <defaults>
</compile_context>

<pallas_src>
import functools

import jax
import jax.numpy as jnp
from jax.experimental import pallas as pl
from jax.experimental.pallas import tpu as pltpu


def _tversky_partials_kernel(x_ref, t_ref, o_ref, *, n_classes, n_rows,
                             rows_per_tile):
    """Per grid step: write per-lane partials [TP, sum(x), #valid] -> (3, 128)."""
    t = t_ref[0]                                            # (R, 128) int32 labels
    lab_ok = jnp.logical_and(t >= 0, t < n_classes)         # label in range?

    if n_rows % rows_per_tile != 0:
        # Ragged last tile: rows past n_rows hold garbage from the partial DMA.
        start = pl.program_id(1) * rows_per_tile
        row = jax.lax.broadcasted_iota(jnp.int32, t.shape, 0)
        row_ok = (start + row) < n_rows
        lab_ok = jnp.logical_and(lab_ok, row_ok)
    else:
        row_ok = None

    tp = jnp.zeros((1, 128), jnp.float32)
    sx = jnp.zeros((1, 128), jnp.float32)
    # Static unroll over the (small) class axis: per-class scalar compare +
    # select; sums over rows are plain VPU adds + one cross-sublane XLU reduce.
    # Keeping temporaries at (R, 128) (not (C, R, 128)) minimizes VMEM pressure.
    for c in range(x_ref.shape[0]):
        xc = x_ref[c].astype(jnp.float32)                   # (R, 128)
        if row_ok is not None:
            xc = jnp.where(row_ok, xc, 0.0)                 # kill garbage rows (select, NaN-safe)
        sx = sx + jnp.sum(xc, axis=0, keepdims=True)
        tp = tp + jnp.sum(jnp.where(t == c, xc, 0.0), axis=0, keepdims=True)

    o_ref[0:1, :] = tp
    o_ref[1:2, :] = sx
    o_ref[2:3, :] = jnp.sum(lab_ok.astype(jnp.float32), axis=0, keepdims=True)


def tversky_loss(inputs, targets, *, alpha, beta, n_classes, smooth=1.0,
                 block_rows=None):
    """inputs: (B, C, H, W) float; targets: (B, 1, H, W) integer class ids."""
    B, C, H, W = inputs.shape
    assert C == n_classes, (C, n_classes)
    hw = H * W

    t = targets.reshape(B, 1, hw)
    if t.dtype != jnp.int32:
        # TODO(synk): stream int8/uint8 labels directly to trim label HBM bytes.
        t = t.astype(jnp.int32)
    x = inputs.reshape(B, C, hw)                             # free reshape

    # Dense (rows, 128) spatial layout: free reshape when hw % 128 == 0 (common
    # case); otherwise pad only up to the next multiple of 128.
    if hw % 128 != 0:
        pad = 128 - hw % 128
        x = jnp.pad(x, ((0, 0), (0, 0), (0, pad)))
        # label == n_classes => all-zero one-hot (matches _one_hot_encoder), and
        # x == 0 there, so padded lanes contribute nothing.
        t = jnp.pad(t, ((0, 0), (0, 0), (0, pad)), constant_values=n_classes)
        hw += pad
    n_rows = hw // 128
    x = x.reshape(B, C, n_rows, 128)
    t = t.reshape(B, 1, n_rows, 128)

    # --- Tile sizing: MiB-scale x blocks, per-generation VMEM aware. ---------
    x_item = int(inputs.dtype.itemsize)
    try:
        vmem_cap = int(getattr(pltpu.get_tpu_info(), "vmem_capacity_bytes",
                               64 << 20))
    except Exception:
        vmem_cap = 64 << 20
    # v7x (64 MiB VMEM, 32 MiB scoped default): ~2 MiB x blocks.
    # v5e/v6e (128 MiB VMEM): ~4 MiB x blocks.
    x_block_budget = (2 << 20) if vmem_cap <= (64 << 20) else (4 << 20)

    row_mult = max(8, 32 // x_item)          # sublane tiling: f32->8, bf16->16, int8->32
    rows_budget = max(row_mult,
                      (x_block_budget // (C * 128 * x_item)) // row_mult * row_mult)
    if block_rows is not None:               # test / tuning hook
        rows_budget = max(row_mult, (block_rows // row_mult) * row_mult)

    rows = n_rows if rows_budget >= n_rows else rows_budget
    n_tiles = -(-n_rows // rows)

    # Give v7x's second TensorCore something to do even for B == 1, 1-tile images.
    if B * n_tiles < 2 and n_rows >= 2 * row_mult:
        rows = ((n_rows // 2 + row_mult - 1) // row_mult) * row_mult
        n_tiles = -(-n_rows // rows)

    # --- VMEM budget: double-buffered input blocks + per-class f32 temporaries.
    x_block_bytes = C * rows * 128 * x_item
    t_block_bytes = rows * 128 * 4
    vmem_need = 2 * (x_block_bytes + t_block_bytes) + 4 * rows * 128 * 4 + (2 << 20)
    vmem_limit = int(min(max(vmem_need, 16 << 20), max(32 << 20, vmem_cap // 2)))

    kernel = functools.partial(_tversky_partials_kernel, n_classes=n_classes,
                               n_rows=n_rows, rows_per_tile=rows)

    partials = pl.pallas_call(
        kernel,
        out_shape=jax.ShapeDtypeStruct((B, n_tiles, 3, 128), jnp.float32),
        grid_spec=pltpu.PrefetchScalarGridSpec(
            num_scalar_prefetch=0,
            grid=(B, n_tiles),
            in_specs=[
                pl.BlockSpec((None, C, rows, 128), lambda b, s: (b, 0, s, 0)),
                pl.BlockSpec((None, 1, rows, 128), lambda b, s: (b, 0, s, 0)),
            ],
            out_specs=pl.BlockSpec((None, None, 3, 128),
                                   lambda b, s: (b, s, 0, 0)),
        ),
        compiler_params=pltpu.CompilerParams(
            # Both axes independent -> v7x megacore can split batch AND space.
            dimension_semantics=("parallel", "parallel"),
            vmem_limit_bytes=vmem_limit,
        ),
    )(x, t)

    # Tiny final reduction + scalar algebra outside the kernel.
    tp = jnp.sum(partials[:, :, 0, :], dtype=jnp.float32)
    s = jnp.sum(partials[:, :, 1, :], dtype=jnp.float32)
    n_valid = jnp.sum(partials[:, :, 2, :], dtype=jnp.float32)
    fp = s - tp                 # == sum((1 - onehot) * x)
    fn = n_valid - tp           # == sum(onehot * (1 - x))
    tversky = (tp + smooth) / (tp + alpha * fp + beta * fn + smooth)
    return 1.0 - tversky


def _reference_loss(inputs, targets, *, alpha, beta, n_classes, smooth=1.0):
    # Pure-JAX reference mirroring the PyTorch module, for a sanity check.
    onehot = jnp.concatenate(
        [(targets == i).astype(jnp.float32) for i in range(n_classes)], axis=1
    )
    x = inputs.reshape(-1).astype(jnp.float32)
    t = onehot.reshape(-1)
    tp = jnp.sum(x * t)
    fp = jnp.sum((1.0 - t) * x)
    fn = jnp.sum(t * (1.0 - x))
    tversky = (tp + smooth) / (tp + alpha * fp + beta * fn + smooth)
    return 1.0 - tversky


if __name__ == "__main__":
    alpha, beta = 0.3, 0.7
    key = jax.random.PRNGKey(0)
    k1, k2, k3, k4, k5, k6 = jax.random.split(key, 6)

    # Case 1: lane-aligned spatial size (16*16 = 256), B=2.
    B, C, H, W = 2, 4, 16, 16
    inputs = jax.nn.softmax(jax.random.normal(k1, (B, C, H, W), jnp.float32), axis=1)
    targets = jax.random.randint(k2, (B, 1, H, W), 0, C, dtype=jnp.int32)
    loss = jax.block_until_ready(
        tversky_loss(inputs, targets, alpha=alpha, beta=beta, n_classes=C))
    ref = _reference_loss(inputs, targets, alpha=alpha, beta=beta, n_classes=C)
    assert jnp.allclose(loss, ref, atol=1e-5, rtol=1e-5), (loss, ref)

    # Case 2: non-128-aligned spatial size (10*10 = 100) -> pad-to-128 path.
    B2, C2, H2, W2 = 1, 3, 10, 10
    inputs2 = jax.nn.softmax(jax.random.normal(k3, (B2, C2, H2, W2), jnp.float32), axis=1)
    targets2 = jax.random.randint(k4, (B2, 1, H2, W2), 0, C2, dtype=jnp.int32)
    loss2 = jax.block_until_ready(
        tversky_loss(inputs2, targets2, alpha=alpha, beta=beta, n_classes=C2))
    ref2 = _reference_loss(inputs2, targets2, alpha=alpha, beta=beta, n_classes=C2)
    assert jnp.allclose(loss2, ref2, atol=1e-5, rtol=1e-5), (loss2, ref2)

    # Case 3: force multiple row-tiles + ragged last tile (60*60 = 3600,
    # block_rows=8 -> 4 tiles, last tile only 5/8 rows valid).
    B3, C3, H3, W3 = 1, 5, 60, 60
    inputs3 = jax.nn.softmax(jax.random.normal(k5, (B3, C3, H3, W3), jnp.float32), axis=1)
    targets3 = jax.random.randint(k6, (B3, 1, H3, W3), 0, C3, dtype=jnp.int32)
    loss3 = jax.block_until_ready(
        tversky_loss(inputs3, targets3, alpha=alpha, beta=beta, n_classes=C3,
                     block_rows=8))
    ref3 = _reference_loss(inputs3, targets3, alpha=alpha, beta=beta, n_classes=C3)
    assert jnp.allclose(loss3, ref3, atol=1e-5, rtol=1e-5), (loss3, ref3)

    print("KERNEL_OK")
</pallas_src>

<mosaic_0001>
module attributes {stable_mosaic.version = 11 : i64} {
  func.func @_tversky_partials_kernel(%arg0: i32, %arg1: i32, %arg2: memref<1x4x2x128xf32, #tpu.memory_space<vmem>>, %arg3: memref<1x1x2x128xi32, #tpu.memory_space<vmem>>, %arg4: memref<1x1x3x128xf32, #tpu.memory_space<vmem>>) attributes {dimension_semantics = [#tpu.dimension_semantics<parallel>, #tpu.dimension_semantics<parallel>], iteration_bounds = array<i64: 2, 1>, scalar_prefetch = 0 : i64, scratch_operands = 0 : i64, tpu.core_type = #tpu.core_type<tc>, window_params = [{transform_indices = @transform_0, window_bounds = array<i64: 1, 4, 2, 128>}, {transform_indices = @transform_1, window_bounds = array<i64: 1, 1, 2, 128>}, {transform_indices = @transform_2, window_bounds = array<i64: 1, 1, 3, 128>}]} {
    %c0 = arith.constant 0 : index
    %c0_0 = arith.constant 0 : index
    %c0_1 = arith.constant 0 : index
    %c0_2 = arith.constant 0 : index
    %0 = vector.load %arg3[%c0, %c0_0, %c0_1, %c0_2] : memref<1x1x2x128xi32, #tpu.memory_space<vmem>>, vector<1x1x2x128xi32>
    %1 = vector.shape_cast %0 : vector<1x1x2x128xi32> to vector<2x128xi32>
    %c0_i32 = arith.constant 0 : i32
    %2 = vector.broadcast %c0_i32 : i32 to vector<2x128xi32>
    %3 = arith.cmpi sge, %1, %2 : vector<2x128xi32>
    %c4_i32 = arith.constant 4 : i32
    %4 = vector.broadcast %c4_i32 : i32 to vector<2x128xi32>
    %5 = arith.cmpi slt, %1, %4 : vector<2x128xi32>
    %6 = arith.andi %3, %5 : vector<2x128xi1>
    %cst = arith.constant 0.000000e+00 : f32
    %7 = vector.broadcast %cst : f32 to vector<1x128xf32>
    %cst_3 = arith.constant 0.000000e+00 : f32
    %8 = vector.broadcast %cst_3 : f32 to vector<1x128xf32>
    %c0_4 = arith.constant 0 : index
    %c0_5 = arith.constant 0 : index
    %c0_6 = arith.constant 0 : index
    %c0_7 = arith.constant 0 : index
    %9 = vector.load %arg2[%c0_4, %c0_5, %c0_6, %c0_7] : memref<1x4x2x128xf32, #tpu.memory_space<vmem>>, vector<1x1x2x128xf32>
    %10 = vector.shape_cast %9 : vector<1x1x2x128xf32> to vector<2x128xf32>
    %cst_8 = arith.constant dense<0.000000e+00> : vector<128xf32>
    %11 = vector.multi_reduction <add>, %10, %cst_8 [0] : vector<2x128xf32> to vector<128xf32>
    %12 = vector.shape_cast %11 : vector<128xf32> to vector<1x128xf32>
    %13 = arith.addf %8, %12 : vector<1x128xf32>
    %c0_i32_9 = arith.constant 0 : i32
    %14 = vector.broadcast %c0_i32_9 : i32 to vector<2x128xi32>
    %15 = arith.cmpi eq, %1, %14 : vector<2x128xi32>
    %cst_10 = arith.constant 0.000000e+00 : f32
    %16 = vector.broadcast %cst_10 : f32 to vector<2x128xf32>
    %17 = arith.select %15, %10, %16 : vector<2x128xi1>, vector<2x128xf32>
    %cst_11 = arith.constant dense<0.000000e+00> : vector<128xf32>
    %18 = vector.multi_reduction <add>, %17, %cst_11 [0] : vector<2x128xf32> to vector<128xf32>
    %19 = vector.shape_cast %18 : vector<128xf32> to vector<1x128xf32>
    %20 = arith.addf %7, %19 : vector<1x128xf32>
    %c0_12 = arith.constant 0 : index
    %c1 = arith.constant 1 : index
    %c0_13 = arith.constant 0 : index
    %c0_14 = arith.constant 0 : index
    %21 = vector.load %arg2[%c0_12, %c1, %c0_13, %c0_14] : memref<1x4x2x128xf32, #tpu.memory_space<vmem>>, vector<1x1x2x128xf32>
    %22 = vector.shape_cast %21 : vector<1x1x2x128xf32> to vector<2x128xf32>
    %cst_15 = arith.constant dense<0.000000e+00> : vector<128xf32>
    %23 = vector.multi_reduction <add>, %22, %cst_15 [0] : vector<2x128xf32> to vector<128xf32>
    %24 = vector.shape_cast %23 : vector<128xf32> to vector<1x128xf32>
    %25 = arith.addf %13, %24 : vector<1x128xf32>
    %c1_i32 = arith.constant 1 : i32
    %26 = vector.broadcast %c1_i32 : i32 to vector<2x128xi32>
    %27 = arith.cmpi eq, %1, %26 : vector<2x128xi32>
    %cst_16 = arith.constant 0.000000e+00 : f32
    %28 = vector.broadcast %cst_16 : f32 to vector<2x128xf32>
    %29 = arith.select %27, %22, %28 : vector<2x128xi1>, vector<2x128xf32>
    %cst_17 = arith.constant dense<0.000000e+00> : vector<128xf32>
    %30 = vector.multi_reduction <add>, %29, %cst_17 [0] : vector<2x128xf32> to vector<128xf32>
    %31 = vector.shape_cast %30 : vector<128xf32> to vector<1x128xf32>
    %32 = arith.addf %20, %31 : vector<1x128xf32>
    %c0_18 = arith.constant 0 : index
    %c2 = arith.constant 2 : index
    %c0_19 = arith.constant 0 : index
    %c0_20 = arith.constant 0 : index
    %33 = vector.load %arg2[%c0_18, %c2, %c0_19, %c0_20] : memref<1x4x2x128xf32, #tpu.memory_space<vmem>>, vector<1x1x2x128xf32>
    %34 = vector.shape_cast %33 : vector<1x1x2x128xf32> to vector<2x128xf32>
    %cst_21 = arith.constant dense<0.000000e+00> : vector<128xf32>
    %35 = vector.multi_reduction <add>, %34, %cst_21 [0] : vector<2x128xf32> to vector<128xf32>
    %36 = vector.shape_cast %35 : vector<128xf32> to vector<1x128xf32>
    %37 = arith.addf %25, %36 : vector<1x128xf32>
    %c2_i32 = arith.constant 2 : i32
    %38 = vector.broadcast %c2_i32 : i32 to vector<2x128xi32>
    %39 = arith.cmpi eq, %1, %38 : vector<2x128xi32>
    %cst_22 = arith.constant 0.000000e+00 : f32
    %40 = vector.broadcast %cst_22 : f32 to vector<2x128xf32>
    %41 = arith.select %39, %34, %40 : vector<2x128xi1>, vector<2x128xf32>
    %cst_23 = arith.constant dense<0.000000e+00> : vector<128xf32>
    %42 = vector.multi_reduction <add>, %41, %cst_23 [0] : vector<2x128xf32> to vector<128xf32>
    %43 = vector.shape_cast %42 : vector<128xf32> to vector<1x128xf32>
    %44 = arith.addf %32, %43 : vector<1x128xf32>
    %c0_24 = arith.constant 0 : index
    %c3 = arith.constant 3 : index
    %c0_25 = arith.constant 0 : index
    %c0_26 = arith.constant 0 : index
    %45 = vector.load %arg2[%c0_24, %c3, %c0_25, %c0_26] : memref<1x4x2x128xf32, #tpu.memory_space<vmem>>, vector<1x1x2x128xf32>
    %46 = vector.shape_cast %45 : vector<1x1x2x128xf32> to vector<2x128xf32>
    %cst_27 = arith.constant dense<0.000000e+00> : vector<128xf32>
    %47 = vector.multi_reduction <add>, %46, %cst_27 [0] : vector<2x128xf32> to vector<128xf32>
    %48 = vector.shape_cast %47 : vector<128xf32> to vector<1x128xf32>
    %49 = arith.addf %37, %48 : vector<1x128xf32>
    %c3_i32 = arith.constant 3 : i32
    %50 = vector.broadcast %c3_i32 : i32 to vector<2x128xi32>
    %51 = arith.cmpi eq, %1, %50 : vector<2x128xi32>
    %cst_28 = arith.constant 0.000000e+00 : f32
    %52 = vector.broadcast %cst_28 : f32 to vector<2x128xf32>
    %53 = arith.select %51, %46, %52 : vector<2x128xi1>, vector<2x128xf32>
    %cst_29 = arith.constant dense<0.000000e+00> : vector<128xf32>
    %54 = vector.multi_reduction <add>, %53, %cst_29 [0] : vector<2x128xf32> to vector<128xf32>
    %55 = vector.shape_cast %54 : vector<128xf32> to vector<1x128xf32>
    %56 = arith.addf %44, %55 : vector<1x128xf32>
    %c0_30 = arith.constant 0 : index
    %c0_31 = arith.constant 0 : index
    %c0_32 = arith.constant 0 : index
    %c0_33 = arith.constant 0 : index
    %57 = vector.load %arg4[%c0_30, %c0_31, %c0_32, %c0_33] : memref<1x1x3x128xf32, #tpu.memory_space<vmem>>, vector<1x1x1x128xf32>
    %58 = vector.shape_cast %57 : vector<1x1x1x128xf32> to vector<1x128xf32>
    %59 = vector.shape_cast %56 : vector<1x128xf32> to vector<1x1x1x128xf32>
    tpu.vector_store %arg4[%c0_30, %c0_31, %c0_32, %c0_33], %59 {strides = array<i32>} : memref<1x1x3x128xf32, #tpu.memory_space<vmem>>, vector<1x1x1x128xf32>,
    %c0_34 = arith.constant 0 : index
    %c0_35 = arith.constant 0 : index
    %c1_36 = arith.constant 1 : index
    %c0_37 = arith.constant 0 : index
    %60 = vector.load %arg4[%c0_34, %c0_35, %c1_36, %c0_37] : memref<1x1x3x128xf32, #tpu.memory_space<vmem>>, vector<1x1x1x128xf32>
    %61 = vector.shape_cast %60 : vector<1x1x1x128xf32> to vector<1x128xf32>
    %62 = vector.shape_cast %49 : vector<1x128xf32> to vector<1x1x1x128xf32>
    tpu.vector_store %arg4[%c0_34, %c0_35, %c1_36, %c0_37], %62 {strides = array<i32>} : memref<1x1x3x128xf32, #tpu.memory_space<vmem>>, vector<1x1x1x128xf32>,
    %63 = arith.extui %6 : vector<2x128xi1> to vector<2x128xi32>
    %64 = arith.sitofp %63 : vector<2x128xi32> to vector<2x128xf32>
    %cst_38 = arith.constant dense<0.000000e+00> : vector<128xf32>
    %65 = vector.multi_reduction <add>, %64, %cst_38 [0] : vector<2x128xf32> to vector<128xf32>
    %66 = vector.shape_cast %65 : vector<128xf32> to vector<1x128xf32>
    %c0_39 = arith.constant 0 : index
    %c0_40 = arith.constant 0 : index
    %c2_41 = arith.constant 2 : index
    %c0_42 = arith.constant 0 : index
    %67 = vector.load %arg4[%c0_39, %c0_40, %c2_41, %c0_42] : memref<1x1x3x128xf32, #tpu.memory_space<vmem>>, vector<1x1x1x128xf32>
    %68 = vector.shape_cast %67 : vector<1x1x1x128xf32> to vector<1x128xf32>
    %69 = vector.shape_cast %66 : vector<1x128xf32> to vector<1x1x1x128xf32>
    tpu.vector_store %arg4[%c0_39, %c0_40, %c2_41, %c0_42], %69 {strides = array<i32>} : memref<1x1x3x128xf32, #tpu.memory_space<vmem>>, vector<1x1x1x128xf32>,
    return
  }
  func.func @transform_0(%arg0: i32, %arg1: i32) -> (i32, i32, i32, i32) {
    %c0_i32 = arith.constant 0 : i32
    %c0_i32_0 = arith.constant 0 : i32
    %c0_i32_1 = arith.constant 0 : i32
    return %arg0, %c0_i32, %arg1, %c0_i32_0 : i32, i32, i32, i32
  }
  func.func @transform_1(%arg0: i32, %arg1: i32) -> (i32, i32, i32, i32) {
    %c0_i32 = arith.constant 0 : i32
    %c0_i32_0 = arith.constant 0 : i32
    %c0_i32_1 = arith.constant 0 : i32
    return %arg0, %c0_i32, %arg1, %c0_i32_0 : i32, i32, i32, i32
  }
  func.func @transform_2(%arg0: i32, %arg1: i32) -> (i32, i32, i32, i32) {
    %c0_i32 = arith.constant 0 : i32
    %c0_i32_0 = arith.constant 0 : i32
    %c0_i32_1 = arith.constant 0 : i32
    return %arg0, %arg1, %c0_i32, %c0_i32_0 : i32, i32, i32, i32
  }
}

</mosaic_0001>

<llo_original>
// kernel: tpu_custom_call.1
$region0: #{tpu_custom_call.1}
  #allocation0 [shape = 'u32[]', space=smem, size = 0x4, offset = 0x4, fixed_abs, tag = 'smem constant byte address 0x4 - core index']
  #allocation1 [shape = 'u32[144,128]{1,0:T(1,128)}', space=vmem, size = 0x12000, scoped, tag = 'internal scratch']
  %s0 = inlined_call_operand.hbm [shape: f32[2,4,2,128], index: 0, kind: input, shape index: {}]
  %s1 = inlined_call_operand.hbm [shape: s32[2,1,2,128], index: 1, kind: input, shape index: {}]
  %s2 = inlined_call_operand.vmem [shape: f32[2,1,3,128], index: 2, kind: output, shape index: {}]
  %s3 = sld [smem:[#allocation0]]
  $region49: #{tpu_custom_call.1} parent=0
    _
  %s5 = ssub.s32 1, %s3
  %s6 = scalar_select 0, %s5, %s3
  $region1: #{tpu_custom_call.1} parent=0
    #allocation2 [shape = 'u8[8192]{0}', space=vmem, size = 0x2000, scoped, tag = 'input window, operand 0']
    #allocation3 [shape = 's32[2]{0}', space=sflag, size = 0x8, scoped, tag = 'scoped memory for tpu_custom_call.1']
    #allocation4 [shape = 'u8[2048]{0}', space=vmem, size = 0x800, scoped, tag = 'input window, operand 1']
    #allocation5 [shape = 's32[2]{0}', space=sflag, size = 0x8, scoped, tag = 'scoped memory for tpu_custom_call.1']
    %7 = vsyncpa [#allocation3], 0
    %s8 = scalar_lea.sflag [#allocation3], 1
    %9 = vsyncpa %s8, 0
    %10 = vsyncpa [#allocation5], 0
    %s11 = scalar_lea.sflag [#allocation5], 1
    %12 = vsyncpa %s11, 0
    loop: start=0, step=1, limit=4
    $region2: #{tpu_custom_call.1} parent=1 // loop_pre_header
      _
    $region3: #{tpu_custom_call.1} parent=1 // loop_header
      %s14 = sphi 0, %s18
      %p15 = scmp.ge.s32.totalorder %s14, 4
      %s21 = sphi 0, %s33
      %s22 = sphi 0, %s29
      %s23 = sphi 0, %s21
      %s24 = sphi 0, %s22
      %s25 = sphi 0, %s23
      %s26 = sphi 0, %s24
      %s38 = sphi 0, %s40
      %s41 = sphi 0, %s38
      %s42 = sphi 0, %s41
      %s58 = sphi 0, %s42
      %s66 = sphi 0, %s68
      %s69 = sphi 0, %s66
      %s70 = sphi 0, %s69
      %s86 = sphi 0, %s70
      %s94 = sphi 0, %s96
      %s97 = sphi 0, %s94
      %s98 = sphi 0, %s97
      %s114 = sphi 0, %s98
    $region4: #{tpu_custom_call.1} parent=1 // loop_header_branch
      %17 = sbr.rel (%p15) target = $region8
    $region5: #{tpu_custom_call.1} parent=1 // loop_body
      %s19 = ssub.s32 %s14, 1
      %s20 = ssub.s32 %s14, 2
      %s27 = sadd.s32 1, %s22
      %p28 = scmp.ge.s32.totalorder %s27, 1
      %s29 = scalar_select %p28, 0, %s27
      %s30 = sadd.s32 1, %s21
      %s31 = scalar_select %p28, %s30, %s21
      %p32 = scmp.ge.s32.totalorder %s31, 2
      %s33 = scalar_select %p32, 0, %s31
      %s34 = ssub.s32 %s21, %s33
      %s35 = ssub.s32 %s22, %s29
      %s36 = sor.u32 %s34, %s35
      %p37 = scmp.eq.s32.totalorder %s36, 0
      %s39 = sadd.s32 %s38, 1
      %s40 = scalar_select %p37, %s38, %s39
      %p43 = pneg %p37
      %p44 = scmp.eq.s32.totalorder %s14, 1
      %p45 = por %p43, %p44
      %p46 = scmp.ne.s32.totalorder %s38, %s41
      %p47 = scmp.eq.s32.totalorder %s14, 0
      %p48 = por %p46, %p47
      %p49 = scmp.ne.s32.totalorder %s38, %s41
      %p50 = scmp.eq.s32.totalorder %s19, 1
      %p51 = por %p49, %p50
      %p52 = scmp.ne.s32.totalorder %s41, %s42
      %p53 = scmp.eq.s32.totalorder %s19, 0
      %p54 = por %p52, %p53
      %p55 = scmp.ne.s32.totalorder %s41, %s42
      %p56 = scmp.eq.s32.totalorder %s20, 1
      %p57 = por %p55, %p56
      %p59 = scmp.ne.s32.totalorder %s42, %s58
      %p60 = scmp.eq.s32.totalorder %s20, 0
      %p61 = por %p59, %p60
      %s62 = ssub.s32 %s21, %s33
      %s63 = ssub.s32 %s22, %s29
      %s64 = sor.u32 %s62, %s63
      %p65 = scmp.eq.s32.totalorder %s64, 0
      %s67 = sadd.s32 %s66, 1
      %s68 = scalar_select %p65, %s66, %s67
      %p71 = pneg %p65
      %p72 = scmp.eq.s32.totalorder %s14, 1
      %p73 = por %p71, %p72
      %p74 = scmp.ne.s32.totalorder %s66, %s69
      %p75 = scmp.eq.s32.totalorder %s14, 0
      %p76 = por %p74, %p75
      %p77 = scmp.ne.s32.totalorder %s66, %s69
      %p78 = scmp.eq.s32.totalorder %s19, 1
      %p79 = por %p77, %p78
      %p80 = scmp.ne.s32.totalorder %s69, %s70
      %p81 = scmp.eq.s32.totalorder %s19, 0
      %p82 = por %p80, %p81
      %p83 = scmp.ne.s32.totalorder %s69, %s70
      %p84 = scmp.eq.s32.totalorder %s20, 1
      %p85 = por %p83, %p84
      %p87 = scmp.ne.s32.totalorder %s70, %s86
      %p88 = scmp.eq.s32.totalorder %s20, 0
      %p89 = por %p87, %p88
      %s90 = ssub.s32 %s21, %s33
      %s91 = ssub.s32 %s22, %s29
      %s92 = sor.u32 %s90, %s91
      %p93 = scmp.eq.s32.totalorder %s92, 0
      %s95 = sadd.s32 %s94, 1
      %s96 = scalar_select %p93, %s94, %s95
      %p99 = pneg %p93
      %p100 = scmp.eq.s32.totalorder %s14, 1
      %p101 = por %p99, %p100
      %p102 = scmp.ne.s32.totalorder %s94, %s97
      %p103 = scmp.eq.s32.totalorder %s14, 0
      %p104 = por %p102, %p103
      %p105 = scmp.ne.s32.totalorder %s94, %s97
      %p106 = scmp.eq.s32.totalorder %s19, 1
      %p107 = por %p105, %p106
      %p108 = scmp.ne.s32.totalorder %s97, %s98
      %p109 = scmp.eq.s32.totalorder %s19, 0
      %p110 = por %p108, %p109
      %p111 = scmp.ne.s32.totalorder %s97, %s98
      %p112 = scmp.eq.s32.totalorder %s20, 1
      %p113 = por %p111, %p112
      %p115 = scmp.ne.s32.totalorder %s98, %s114
      %p116 = scmp.eq.s32.totalorder %s20, 0
      %p117 = por %p115, %p116
      %p118 = scmp.le.s32.totalorder 1, %s14
      %p119 = scmp.lt.s32.totalorder %s14, 3
      %p120 = pnand %p118, %p119
      %p121 = pneg %p120
      // Predicated region
      $region9: #{tpu_custom_call.1} parent=5 // pred_check
        _
      $region10: #{tpu_custom_call.1} parent=5 // pred_check_branch
        %123 = sbr.rel (%p120) target = $region12
      $region11: #{tpu_custom_call.1} parent=5 // pred_region
        %s124 = ssub.s32 %s14, 1
      $region12: #{tpu_custom_call.1} parent=5 // pred_fallthru
        _
      %p125 = scmp.lt.s32.totalorder %s14, 2
      // Predicated region
      $region13: #{tpu_custom_call.1} parent=5 // pred_check
        %p126 = pneg %p125
      $region14: #{tpu_custom_call.1} parent=5 // pred_check_branch
        %128 = sbr.rel (%p126) target = $region16
      $region15: #{tpu_custom_call.1} parent=5 // pred_region
        // Predicated region
        $region17: #{tpu_custom_call.1} parent=15 // pred_check
          %p129 = pneg %p48
        $region18: #{tpu_custom_call.1} parent=15 // pred_check_branch
          %131 = sbr.rel (%p129) target = $region20
        $region19: #{tpu_custom_call.1} parent=15 // pred_region
          %s132 = sand.u32 %s38, 1
          %s133 = scalar_lea.sflag [#allocation3], %s132
          %s134 = sand.u32 %s38, 1
          %s135 = smul.addr %s134, 8
          %s136 = scalar_lea.vmem [#allocation2], %s135
          %s138 = ssub.s32 128, 128
          %139 = vsyncadd %s133, %s138
          %s140 = smul.addr %s21, 4
          %s141 = sadd.s32 %s22, %s140
          %s142 = smul.addr %s141, 32
          %s143 = scalar_lea.hbm %s0, %s142
          %s144 = sshll.u32 %s136, 4
          %s145 = int_to_ptr.vmem [resolvable:$true] %s144
          %150 = dma.hbm_to_vmem [thread:$0]  %s143, 128, %s145, %s133, 32, 32, 2
        $region20: #{tpu_custom_call.1} parent=15 // pred_fallthru
          _
        // Predicated region
        $region21: #{tpu_custom_call.1} parent=15 // pred_check
          %p151 = pneg %p76
        $region22: #{tpu_custom_call.1} parent=15 // pred_check_branch
          %153 = sbr.rel (%p151) target = $region24
        $region23: #{tpu_custom_call.1} parent=15 // pred_region
          %s154 = sand.u32 %s66, 1
          %s155 = scalar_lea.sflag [#allocation5], %s154
          %s156 = sand.u32 %s66, 1
          %s157 = smul.addr %s156, 2
          %s158 = scalar_lea.vmem [#allocation4], %s157
          %s160 = ssub.s32 32, 32
          %161 = vsyncadd %s155, %s160
          %s162 = sadd.s32 %s22, %s21
          %s163 = smul.addr %s162, 32
          %s164 = scalar_lea.hbm %s1, %s163
          %s166 = sshll.u32 %s158, 4
          %s167 = int_to_ptr.vmem [resolvable:$true] %s166
          %169 = dma.hbm_to_vmem [thread:$0]  %s164, 32, %s167, %s155
        $region24: #{tpu_custom_call.1} parent=15 // pred_fallthru
          _
      $region16: #{tpu_custom_call.1} parent=5 // pred_fallthru
        _
      %p170 = scmp.le.s32.totalorder 1, %s14
      %p171 = scmp.lt.s32.totalorder %s14, 3
      %p172 = pnand %p170, %p171
      %p173 = pneg %p172
      // Predicated region
      $region25: #{tpu_custom_call.1} parent=5 // pred_check
        _
      $region26: #{tpu_custom_call.1} parent=5 // pred_check_branch
        %175 = sbr.rel (%p172) target = $region28
      $region27: #{tpu_custom_call.1} parent=5 // pred_region
        %s176 = ssub.s32 %s14, 1
        %s177 = sand.u32 %s41, 1
        %s178 = scalar_lea.sflag [#allocation3], %s177
        %s179 = sand.u32 %s41, 1
        %s180 = smul.addr %s179, 8
        %s181 = scalar_lea.vmem [#allocation2], %s180
        // Predicated region
        $region29: #{tpu_custom_call.1} parent=27 // pred_check
          %p182 = pneg %p54
        $region30: #{tpu_custom_call.1} parent=27 // pred_check_branch
          %184 = sbr.rel (%p182) target = $region32
        $region31: #{tpu_custom_call.1} parent=27 // pred_region
          %185 = dma.done %s178, 128
        $region32: #{tpu_custom_call.1} parent=27 // pred_fallthru
          _
        %s186 = sand.u32 %s69, 1
        %s187 = scalar_lea.sflag [#allocation5], %s186
        %s188 = sand.u32 %s69, 1
        %s189 = smul.addr %s188, 2
        %s190 = scalar_lea.vmem [#allocation4], %s189
        // Predicated region
        $region33: #{tpu_custom_call.1} parent=27 // pred_check
          %p191 = pneg %p82
        $region34: #{tpu_custom_call.1} parent=27 // pred_check_branch
          %193 = sbr.rel (%p191) target = $region36
        $region35: #{tpu_custom_call.1} parent=27 // pred_region
          %194 = dma.done %s187, 32
        $region36: #{tpu_custom_call.1} parent=27 // pred_fallthru
          _
        %s195 = sand.u32 %s41, 1
        %s196 = scalar_lea.sflag [#allocation3], %s195
        %s197 = sand.u32 %s41, 1
        %s198 = smul.addr %s197, 8
        %s199 = scalar_lea.vmem [#allocation2], %s198
        %p200 = pneg %p54
        %p201 = pneg %p51
        %s202 = sand.u32 %s69, 1
        %s203 = scalar_lea.sflag [#allocation5], %s202
        %s204 = sand.u32 %s69, 1
        %s205 = smul.addr %s204, 2
        %s206 = scalar_lea.vmem [#allocation4], %s205
        %p207 = pneg %p82
        %p208 = pneg %p79
        %p209 = pneg %p110
        %p210 = pneg %p107
        %p211 = scmp.lt.s32.totalorder %s23, 1
        %s212 = scalar_select %p211, %s23, 1
        %p213 = scmp.lt.s32.totalorder %s24, 0
        %s214 = scalar_select %p213, %s24, 0
        %s215 = sadd.s32 %s214, %s212
        %s216 = smul.addr %s215, 4
        %s217 = scalar_lea.vmem %s2, %s216
        %p218 = scmp.lt.s32.totalorder %s23, 1
        %s219 = scalar_select %p218, %s23, 1
        %p220 = scmp.lt.s32.totalorder %s24, 0
        %s221 = scalar_select %p220, %s24, 0
        %s222 = sadd.s32 %s221, %s219
        %s223 = smul.addr %s222, 4
        %s224 = scalar_lea.vmem %s2, %s223
        %v225 = vld [vmem:[%s190] sm:$0x3]
        %vm226 = vcmp.ge.s32.totalorder %v225, 0
        %vm227 = vcmp.lt.s32.totalorder %v225, 4
        %vm228 = vmand %vm226, %vm227
        %v229 = vld [vmem:[%s181] sm:$0x3]
        %vm230 = vcmask 1041408
        %v231 = vsel %vm230, %v229, 0.0
        %v232 = vrot.slane %v231, 4
        %v233 = vadd.f32 %v231, %v232
        %v234 = vrot.slane %v233, 2
        %v235 = vadd.f32 %v233, %v234
        %v236 = vrot.slane %v235, 1
        %v237 = vadd.f32 %v235, %v236
        %v238 = vadd.f32 %v237, 0.0
        %vm239 = vcmp.eq.s32.totalorder %v225, 0
        %v240 = vsel %vm239, %v229, 0.0
        %v241 = vsel %vm230, %v240, 0.0
        %v242 = vrot.slane %v241, 4
        %v243 = vadd.f32 %v241, %v242
        %v244 = vrot.slane %v243, 2
        %v245 = vadd.f32 %v243, %v244
        %v246 = vrot.slane %v245, 1
        %v247 = vadd.f32 %v245, %v246
        %v248 = vadd.f32 %v247, 0.0
        %s249 = scalar_lea.vmem %s181, 2 [#allocation2]
        %v250 = vld [vmem:[%s249] sm:$0x3]
        %v251 = vsel %vm230, %v250, 0.0
        %v252 = vrot.slane %v251, 4
        %v253 = vadd.f32 %v251, %v252
        %v254 = vrot.slane %v253, 2
        %v255 = vadd.f32 %v253, %v254
        %v256 = vrot.slane %v255, 1
        %v257 = vadd.f32 %v255, %v256
        %v258 = vadd.f32 %v238, %v257
        %vm259 = vcmp.eq.s32.totalorder %v225, 1
        %v260 = vsel %vm259, %v250, 0.0
        %v261 = vsel %vm230, %v260, 0.0
        %v262 = vrot.slane %v261, 4
        %v263 = vadd.f32 %v261, %v262
        %v264 = vrot.slane %v263, 2
        %v265 = vadd.f32 %v263, %v264
        %v266 = vrot.slane %v265, 1
        %v267 = vadd.f32 %v265, %v266
        %v268 = vadd.f32 %v248, %v267
        %s269 = scalar_lea.vmem %s181, 4 [#allocation2]
        %v270 = vld [vmem:[%s269] sm:$0x3]
        %v271 = vsel %vm230, %v270, 0.0
        %v272 = vrot.slane %v271, 4
        %v273 = vadd.f32 %v271, %v272
        %v274 = vrot.slane %v273, 2
        %v275 = vadd.f32 %v273, %v274
        %v276 = vrot.slane %v275, 1
        %v277 = vadd.f32 %v275, %v276
        %v278 = vadd.f32 %v258, %v277
        %vm279 = vcmp.eq.s32.totalorder %v225, 2
        %v280 = vsel %vm279, %v270, 0.0
        %v281 = vsel %vm230, %v280, 0.0
        %v282 = vrot.slane %v281, 4
        %v283 = vadd.f32 %v281, %v282
        %v284 = vrot.slane %v283, 2
        %v285 = vadd.f32 %v283, %v284
        %v286 = vrot.slane %v285, 1
        %v287 = vadd.f32 %v285, %v286
        %v288 = vadd.f32 %v268, %v287
        %s289 = scalar_lea.vmem %s181, 6 [#allocation2]
        %v290 = vld [vmem:[%s289] sm:$0x3]
        %v291 = vsel %vm230, %v290, 0.0
        %v292 = vrot.slane %v291, 4
        %v293 = vadd.f32 %v291, %v292
        %v294 = vrot.slane %v293, 2
        %v295 = vadd.f32 %v293, %v294
        %v296 = vrot.slane %v295, 1
        %v297 = vadd.f32 %v295, %v296
        %v298 = vadd.f32 %v278, %v297
        %vm299 = vcmp.eq.s32.totalorder %v225, 3
        %v300 = vsel %vm299, %v290, 0.0
        %v301 = vsel %vm230, %v300, 0.0
        %v302 = vrot.slane %v301, 4
        %v303 = vadd.f32 %v301, %v302
        %v304 = vrot.slane %v303, 2
        %v305 = vadd.f32 %v303, %v304
        %v306 = vrot.slane %v305, 1
        %v307 = vadd.f32 %v305, %v306
        %v308 = vadd.f32 %v288, %v307
        %309 = vst [vmem:[%s224] sm:$0x1] %v308
        %310 = vst [vmem:[%s224 + $0x1] sm:$0x1] %v298
        %v311 = vsel %vm228, 1, 0
        %v312 = vcvt.s32.f32 %v311
        %v313 = vsel %vm230, %v312, 0.0
        %v314 = vrot.slane %v313, 4
        %v315 = vadd.f32 %v313, %v314
        %v316 = vrot.slane %v315, 2
        %v317 = vadd.f32 %v315, %v316
        %v318 = vrot.slane %v317, 1
        %v319 = vadd.f32 %v317, %v318
        %320 = vst [vmem:[%s224 + $0x2] sm:$0x1] %v319
        %p321 = scmp.lt.s32.totalorder %s23, 1
        %s322 = scalar_select %p321, %s23, 1
        %p323 = scmp.lt.s32.totalorder %s24, 0
        %s324 = scalar_select %p323, %s24, 0
        %s325 = sadd.s32 %s324, %s322
        %s326 = smul.addr %s325, 4
        %s327 = scalar_lea.vmem %s2, %s326
        // Predicated region
        $region37: #{tpu_custom_call.1} parent=27 // pred_check
          %p328 = pneg %p107
        $region38: #{tpu_custom_call.1} parent=27 // pred_check_branch
          %330 = sbr.rel (%p328) target = $region40
        $region39: #{tpu_custom_call.1} parent=27 // pred_region
          _
        $region40: #{tpu_custom_call.1} parent=27 // pred_fallthru
          _
      $region28: #{tpu_custom_call.1} parent=5 // pred_fallthru
        _
      %p331 = scmp.le.s32.totalorder 2, %s14
      // Predicated region
      $region41: #{tpu_custom_call.1} parent=5 // pred_check
        %p332 = pneg %p331
      $region42: #{tpu_custom_call.1} parent=5 // pred_check_branch
        %334 = sbr.rel (%p332) target = $region44
      $region43: #{tpu_custom_call.1} parent=5 // pred_region
        %s335 = ssub.s32 %s14, 2
        // Predicated region
        $region45: #{tpu_custom_call.1} parent=43 // pred_check
          %p336 = pneg %p113
        $region46: #{tpu_custom_call.1} parent=43 // pred_check_branch
          %338 = sbr.rel (%p336) target = $region48
        $region47: #{tpu_custom_call.1} parent=43 // pred_region
          %p339 = scmp.lt.s32.totalorder %s25, 1
          %s340 = scalar_select %p339, %s25, 1
          %p341 = scmp.lt.s32.totalorder %s26, 0
          %s342 = scalar_select %p341, %s26, 0
          %s343 = sadd.s32 %s342, %s340
          %s344 = smul.addr %s343, 4
          %s345 = scalar_lea.vmem %s2, %s344
        $region48: #{tpu_custom_call.1} parent=43 // pred_fallthru
          _
      $region44: #{tpu_custom_call.1} parent=5 // pred_fallthru
        _
    $region6: #{tpu_custom_call.1} parent=1 // loop_footer
      %s18 = sadd.s32 1, %s14
    $region7: #{tpu_custom_call.1} parent=1 // loop_footer_branch
      %13 = sbr.rel target = $region3
    $region8: #{tpu_custom_call.1} parent=1 // loop_exit
      _
    %346 = vsyncpa [#allocation3], 1
    %s347 = scalar_lea.sflag [#allocation3], 1
    %348 = vsyncpa %s347, 1
    %349 = vsyncpa [#allocation5], 1
    %s350 = scalar_lea.sflag [#allocation5], 1
    %351 = vsyncpa %s350, 1

</llo_original>
